<compile_context>
chip_gen: v5e
topology: v5e:2x2
jax: 0.10.0
libtpu: 0.0.40
codegen_flags: <defaults>
</compile_context>

<pallas_src>
import jax
import jax.numpy as jnp
import numpy as np
from jax import lax
from jax.experimental import pallas as pl
from jax.experimental.pallas import tpu as pltpu

LN_EPS = 1e-5  # nn.LayerNorm default


def _esa_spec_kernel(hs_ref, mask_ref, wcat_ref, bcat_ref, out_ref):
    # hs_ref:   (Bt, S, F)   native activation dtype (f32 or bf16)
    # mask_ref: (Bt, S, 1)   f32, exact 0/1
    # wcat_ref: (F, 2*O)     bf16   [gamma*W1 | gamma*W1@W2]
    # bcat_ref: (1, 2*O)     f32    [beta@W1+b1 | (beta@W1+b1)@W2+b2]
    # out_ref:  (Bt, 1, O)   f32
    Bt, S, F = hs_ref.shape
    O = wcat_ref.shape[1] // 2

    # ---- LayerNorm over features (f32 VPU math; affine folded into wcat/bcat).
    # Cast to f32 *before* collapsing so the reshape is a free sublane regroup
    # even when hidden_states arrive as bf16 (S=8 < 16 packed sublanes).
    x = hs_ref[...].astype(jnp.float32).reshape(Bt * S, F)
    mean = jnp.mean(x, axis=-1, keepdims=True)
    centered = x - mean
    var = jnp.mean(centered * centered, axis=-1, keepdims=True)
    xn = centered * lax.rsqrt(var + LN_EPS)                       # (Bt*S, F)

    # ---- fused linear + linear1 as ONE wide MXU matmul (bf16 operands, f32 acc).
    capfin = jnp.dot(xn.astype(wcat_ref.dtype), wcat_ref[...],
                     preferred_element_type=jnp.float32)
    capfin = capfin + bcat_ref[...].astype(jnp.float32)           # (Bt*S, 2*O)

    capfin = capfin.reshape(Bt, S, 2 * O)                         # free (f32, S=8)
    cap = capfin[:, :, :O]                                        # (Bt, S, O)
    fin = capfin[:, :, O:]                                        # (Bt, S, O)

    # ---- masked softmax over the sequence axis (dim=1).
    mask = mask_ref[...].astype(jnp.float32)                      # (Bt, S, 1), 0/1
    # masked_fill(mask==0, -1e4) as a single FMA; masked logits differ from the
    # exact -1e4 of the reference only by O(1) terms that underflow in exp().
    fin = fin + (mask - 1.0) * 10000.0

    m = jnp.max(fin, axis=1, keepdims=True)                       # (Bt, 1, O)
    e = jnp.exp(fin - m)
    denom = jnp.sum(e, axis=1, keepdims=True)                     # (Bt, 1, O)
    attn = e * pl.reciprocal(denom, approx=True)                  # EUP vrcp
    attn = attn * mask                                            # masked_fill(.., 0)

    # spec_feature = sum_S(attn * cap_embes); keepdims keeps the sublane-reduce
    # in the standard layout, wrapper squeezes the size-1 axis.
    out_ref[...] = jnp.sum(attn * cap, axis=1, keepdims=True).astype(out_ref.dtype)


def esa_spec_forward(hidden_states, attention_mask, params, *,
                     block_b=512, vmem_limit_bytes=48 * 1024 * 1024):
    """hidden_states: (B, S, F), attention_mask: (B, S) 0/1, params dict -> (B, O)."""
    B, S, F = hidden_states.shape
    O = params["w1"].shape[1]

    # ---- fold LayerNorm affine + both Linear layers into one (F, 2O) weight ----
    gamma = params["gamma"].astype(jnp.float32)
    beta = params["beta"].astype(jnp.float32)
    w1 = params["w1"].astype(jnp.float32)
    b1 = params["b1"].astype(jnp.float32)
    w2 = params["w2"].astype(jnp.float32)
    b2 = params["b2"].astype(jnp.float32)

    w1f = gamma[:, None] * w1                    # diag(gamma) @ W1        (F, O)
    b1f = beta @ w1 + b1                         # beta @ W1 + b1          (O,)
    w12 = w1f @ w2                               # diag(gamma) @ W1 @ W2   (F, O)
    b12 = b1f @ w2 + b2                          #                         (O,)
    wcat = jnp.concatenate([w1f, w12], axis=1).astype(jnp.bfloat16)   # (F, 2O)
    bcat = jnp.concatenate([b1f, b12]).reshape(1, 2 * O)              # (1, 2O) f32

    # ---- batch tiling: big VMEM-budget-aware tiles, >=2 grid steps when B>=16
    # so the batch axis shards across both TensorCores on v7x.
    if B < 16:
        n_steps, Bt = 1, B
    else:
        bb = max(8, (int(block_b) // 8) * 8)
        n_steps = max(2, pl.cdiv(B, bb))
        Bt = pl.cdiv(pl.cdiv(B, n_steps), 8) * 8
    B_pad = n_steps * Bt

    if B_pad != B:
        hidden_states = jnp.pad(hidden_states, ((0, B_pad - B), (0, 0), (0, 0)))
        attention_mask = jnp.pad(attention_mask, ((0, B_pad - B), (0, 0)))
    mask3 = attention_mask.reshape(B_pad, S, 1).astype(jnp.float32)

    grid_spec = pltpu.PrefetchScalarGridSpec(
        num_scalar_prefetch=0,
        grid=(n_steps,),
        in_specs=[
            pl.BlockSpec((Bt, S, F), lambda b: (b, 0, 0)),    # hidden_states (native dtype)
            pl.BlockSpec((Bt, S, 1), lambda b: (b, 0, 0)),    # mask
            pl.BlockSpec((F, 2 * O), lambda b: (0, 0)),       # fused weights (VMEM-resident)
            pl.BlockSpec((1, 2 * O), lambda b: (0, 0)),       # fused bias    (VMEM-resident)
        ],
        out_specs=pl.BlockSpec((Bt, 1, O), lambda b: (b, 0, 0)),
    )

    out = pl.pallas_call(
        _esa_spec_kernel,
        out_shape=jax.ShapeDtypeStruct((B_pad, 1, O), jnp.float32),
        grid_spec=grid_spec,
        compiler_params=pltpu.CompilerParams(
            dimension_semantics=("parallel",),
            vmem_limit_bytes=int(vmem_limit_bytes)),
    )(hidden_states, mask3, wcat, bcat)

    return out[:B, 0, :]


def esa_spec_reference(hidden_states, attention_mask, params):
    """Pure-JAX f32 reference mirroring the PyTorch forward."""
    x = hidden_states.astype(jnp.float32)
    mean = jnp.mean(x, axis=-1, keepdims=True)
    var = jnp.mean((x - mean) ** 2, axis=-1, keepdims=True)
    ln = (x - mean) / jnp.sqrt(var + LN_EPS) * params["gamma"] + params["beta"]
    cap = ln @ params["w1"] + params["b1"]
    fin = cap @ params["w2"] + params["b2"]
    mask = attention_mask[:, :, None]
    fin = jnp.where(mask == 0, -10000.0, fin)
    sm = jax.nn.softmax(fin, axis=1)
    attn = jnp.where(mask == 0, 0.0, sm)
    return jnp.sum(attn * cap, axis=1)


def make_params(key, feature_dim, out_dim):
    k1, k2, k3, k4, k5, k6 = jax.random.split(key, 6)
    return {
        "gamma": 1.0 + 0.1 * jax.random.normal(k5, (feature_dim,), jnp.float32),
        "beta": 0.05 * jax.random.normal(k6, (feature_dim,), jnp.float32),
        "w1": jax.random.normal(k1, (feature_dim, out_dim), jnp.float32) * 0.05,
        "b1": jax.random.normal(k2, (out_dim,), jnp.float32) * 0.01,
        "w2": jax.random.normal(k3, (out_dim, out_dim), jnp.float32) * 0.05,
        "b2": jax.random.normal(k4, (out_dim,), jnp.float32) * 0.01,
    }


if __name__ == "__main__":
    key = jax.random.PRNGKey(0)
    k_x, k_p, k_x2, k_x3 = jax.random.split(key, 4)

    B, S, FEATURE_DIM, OUT_DIM = 2, 8, 32, 32
    params = make_params(k_p, FEATURE_DIM, OUT_DIM)

    # --- Case 1: spec-sized example (single grid step) ---
    hidden_states = jax.random.normal(k_x, (B, S, FEATURE_DIM), jnp.float32)
    attention_mask = jnp.ones((B, S), jnp.float32).at[1, S - 2:].set(0.0)
    out = jax.block_until_ready(esa_spec_forward(hidden_states, attention_mask, params))
    ref = esa_spec_reference(hidden_states, attention_mask, params)
    np.testing.assert_allclose(np.asarray(out), np.asarray(ref), rtol=2e-2, atol=5e-3)

    # --- Case 2: larger batch -> multi-step grid + batch padding + all-masked row ---
    B2 = 20
    hs2 = jax.random.normal(k_x2, (B2, S, FEATURE_DIM), jnp.float32)
    mask2 = jnp.ones((B2, S), jnp.float32).at[3, :].set(0.0).at[7, S - 3:].set(0.0)
    out2 = jax.block_until_ready(esa_spec_forward(hs2, mask2, params))
    ref2 = esa_spec_reference(hs2, mask2, params)
    np.testing.assert_allclose(np.asarray(out2), np.asarray(ref2), rtol=2e-2, atol=5e-3)

    # --- Case 3: bf16 activations path (halves HBM read traffic at scale) ---
    hs3 = jax.random.normal(k_x3, (4, S, FEATURE_DIM), jnp.float32).astype(jnp.bfloat16)
    mask3_ = jnp.ones((4, S), jnp.float32).at[2, S - 4:].set(0.0)
    out3 = jax.block_until_ready(esa_spec_forward(hs3, mask3_, params))
    ref3 = esa_spec_reference(hs3.astype(jnp.float32), mask3_, params)
    np.testing.assert_allclose(np.asarray(out3), np.asarray(ref3), rtol=2e-2, atol=5e-3)

    print("KERNEL_OK")
</pallas_src>

<mosaic_0001>
module attributes {stable_mosaic.version = 11 : i64} {
  func.func @_esa_spec_kernel(%arg0: i32, %arg1: memref<2x8x32xf32, #tpu.memory_space<vmem>>, %arg2: memref<2x8x1xf32, #tpu.memory_space<vmem>>, %arg3: memref<32x64xbf16, #tpu.memory_space<vmem>>, %arg4: memref<1x64xf32, #tpu.memory_space<vmem>>, %arg5: memref<2x1x32xf32, #tpu.memory_space<vmem>>) attributes {dimension_semantics = [#tpu.dimension_semantics<parallel>], iteration_bounds = array<i64: 1>, scalar_prefetch = 0 : i64, scratch_operands = 0 : i64, tpu.core_type = #tpu.core_type<tc>, window_params = [{transform_indices = @transform_0, window_bounds = array<i64: 2, 8, 32>}, {transform_indices = @transform_1, window_bounds = array<i64: 2, 8, 1>}, {pipeline_mode = #tpu.pipeline_mode<synchronous>, transform_indices = @transform_2, window_bounds = array<i64: 32, 64>}, {pipeline_mode = #tpu.pipeline_mode<synchronous>, transform_indices = @transform_3, window_bounds = array<i64: 1, 64>}, {transform_indices = @transform_4, window_bounds = array<i64: 2, 1, 32>}]} {
    %c0 = arith.constant 0 : index
    %c0_0 = arith.constant 0 : index
    %c0_1 = arith.constant 0 : index
    %0 = vector.load %arg1[%c0, %c0_0, %c0_1] : memref<2x8x32xf32, #tpu.memory_space<vmem>>, vector<2x8x32xf32>
    %1 = vector.shape_cast %0 : vector<2x8x32xf32> to vector<16x32xf32>
    %cst = arith.constant dense<0.000000e+00> : vector<16xf32>
    %2 = vector.multi_reduction <add>, %1, %cst [1] : vector<16x32xf32> to vector<16xf32>
    %3 = vector.shape_cast %2 : vector<16xf32> to vector<16x1xf32>
    %cst_2 = arith.constant 3.200000e+01 : f32
    %4 = vector.broadcast %cst_2 : f32 to vector<16x1xf32>
    %5 = arith.divf %3, %4 : vector<16x1xf32>
    %6 = vector.broadcast %5 : vector<16x1xf32> to vector<16x32xf32>
    %7 = arith.subf %1, %6 : vector<16x32xf32>
    %8 = arith.mulf %7, %7 : vector<16x32xf32>
    %cst_3 = arith.constant dense<0.000000e+00> : vector<16xf32>
    %9 = vector.multi_reduction <add>, %8, %cst_3 [1] : vector<16x32xf32> to vector<16xf32>
    %10 = vector.shape_cast %9 : vector<16xf32> to vector<16x1xf32>
    %cst_4 = arith.constant 3.200000e+01 : f32
    %11 = vector.broadcast %cst_4 : f32 to vector<16x1xf32>
    %12 = arith.divf %10, %11 : vector<16x1xf32>
    %cst_5 = arith.constant 9.99999974E-6 : f32
    %13 = vector.broadcast %cst_5 : f32 to vector<16x1xf32>
    %14 = arith.addf %12, %13 : vector<16x1xf32>
    %15 = math.rsqrt %14 : vector<16x1xf32>
    %16 = vector.broadcast %15 : vector<16x1xf32> to vector<16x32xf32>
    %17 = arith.mulf %7, %16 : vector<16x32xf32>
    %18 = arith.truncf %17 : vector<16x32xf32> to vector<16x32xbf16>
    %c0_6 = arith.constant 0 : index
    %c0_7 = arith.constant 0 : index
    %19 = vector.load %arg3[%c0_6, %c0_7] : memref<32x64xbf16, #tpu.memory_space<vmem>>, vector<32x64xbf16>
    %cst_8 = arith.constant dense<0.000000e+00> : vector<16x64xf32>
    %20 = tpu.matmul %18, %19, %cst_8 {dimension_numbers = #tpu.dot_dimension_numbers<[1], [0], [0], [1], [0, 0, 1, 1], [], []>} : vector<16x32xbf16>, vector<32x64xbf16>, vector<16x64xf32> -> vector<16x64xf32>
    %c0_9 = arith.constant 0 : index
    %c0_10 = arith.constant 0 : index
    %21 = vector.load %arg4[%c0_9, %c0_10] : memref<1x64xf32, #tpu.memory_space<vmem>>, vector<1x64xf32>
    %22 = vector.broadcast %21 : vector<1x64xf32> to vector<16x64xf32>
    %23 = arith.addf %20, %22 : vector<16x64xf32>
    %24 = vector.shape_cast %23 : vector<16x64xf32> to vector<2x8x64xf32>
    %25 = vector.extract_strided_slice %24 {offsets = [0, 0, 0], sizes = [2, 8, 32], strides = [1, 1, 1]} : vector<2x8x64xf32> to vector<2x8x32xf32>
    %26 = vector.extract_strided_slice %24 {offsets = [0, 0, 32], sizes = [2, 8, 32], strides = [1, 1, 1]} : vector<2x8x64xf32> to vector<2x8x32xf32>
    %c0_11 = arith.constant 0 : index
    %c0_12 = arith.constant 0 : index
    %c0_13 = arith.constant 0 : index
    %27 = vector.load %arg2[%c0_11, %c0_12, %c0_13] : memref<2x8x1xf32, #tpu.memory_space<vmem>>, vector<2x8x1xf32>
    %cst_14 = arith.constant 1.000000e+00 : f32
    %28 = vector.broadcast %cst_14 : f32 to vector<2x8x1xf32>
    %29 = arith.subf %27, %28 : vector<2x8x1xf32>
    %cst_15 = arith.constant 1.000000e+04 : f32
    %30 = vector.broadcast %cst_15 : f32 to vector<2x8x1xf32>
    %31 = arith.mulf %29, %30 : vector<2x8x1xf32>
    %32 = vector.broadcast %31 : vector<2x8x1xf32> to vector<2x8x32xf32>
    %33 = arith.addf %26, %32 : vector<2x8x32xf32>
    %cst_16 = arith.constant dense<0xFF800000> : vector<2x32xf32>
    %34 = vector.multi_reduction <maximumf>, %33, %cst_16 [1] : vector<2x8x32xf32> to vector<2x32xf32>
    %35 = vector.shape_cast %34 : vector<2x32xf32> to vector<2x1x32xf32>
    %36 = vector.broadcast %35 : vector<2x1x32xf32> to vector<2x8x32xf32>
    %37 = arith.subf %33, %36 : vector<2x8x32xf32>
    %38 = math.exp %37 : vector<2x8x32xf32>
    %cst_17 = arith.constant dense<0.000000e+00> : vector<2x32xf32>
    %39 = vector.multi_reduction <add>, %38, %cst_17 [1] : vector<2x8x32xf32> to vector<2x32xf32>
    %40 = vector.shape_cast %39 : vector<2x32xf32> to vector<2x1x32xf32>
    %41 = tpu.reciprocal %40 {approx = true} : vector<2x1x32xf32> -> vector<2x1x32xf32>
    %42 = vector.broadcast %41 : vector<2x1x32xf32> to vector<2x8x32xf32>
    %43 = arith.mulf %38, %42 : vector<2x8x32xf32>
    %44 = vector.broadcast %27 : vector<2x8x1xf32> to vector<2x8x32xf32>
    %45 = arith.mulf %43, %44 : vector<2x8x32xf32>
    %46 = arith.mulf %45, %25 : vector<2x8x32xf32>
    %cst_18 = arith.constant dense<0.000000e+00> : vector<2x32xf32>
    %47 = vector.multi_reduction <add>, %46, %cst_18 [1] : vector<2x8x32xf32> to vector<2x32xf32>
    %48 = vector.shape_cast %47 : vector<2x32xf32> to vector<2x1x32xf32>
    %c0_19 = arith.constant 0 : index
    %c0_20 = arith.constant 0 : index
    %c0_21 = arith.constant 0 : index
    %49 = vector.load %arg5[%c0_19, %c0_20, %c0_21] : memref<2x1x32xf32, #tpu.memory_space<vmem>>, vector<2x1x32xf32>
    tpu.vector_store %arg5[%c0_19, %c0_20, %c0_21], %48 {strides = array<i32>} : memref<2x1x32xf32, #tpu.memory_space<vmem>>, vector<2x1x32xf32>,
    return
  }
  func.func @transform_0(%arg0: i32) -> (i32, i32, i32) {
    %c0_i32 = arith.constant 0 : i32
    %c0_i32_0 = arith.constant 0 : i32
    %c0_i32_1 = arith.constant 0 : i32
    return %arg0, %c0_i32, %c0_i32_0 : i32, i32, i32
  }
  func.func @transform_1(%arg0: i32) -> (i32, i32, i32) {
    %c0_i32 = arith.constant 0 : i32
    %c0_i32_0 = arith.constant 0 : i32
    %c0_i32_1 = arith.constant 0 : i32
    return %arg0, %c0_i32, %c0_i32_0 : i32, i32, i32
  }
  func.func @transform_2(%arg0: i32) -> (i32, i32) {
    %c0_i32 = arith.constant 0 : i32
    %c0_i32_0 = arith.constant 0 : i32
    %c0_i32_1 = arith.constant 0 : i32
    return %c0_i32, %c0_i32_0 : i32, i32
  }
  func.func @transform_3(%arg0: i32) -> (i32, i32) {
    %c0_i32 = arith.constant 0 : i32
    %c0_i32_0 = arith.constant 0 : i32
    %c0_i32_1 = arith.constant 0 : i32
    return %c0_i32, %c0_i32_0 : i32, i32
  }
  func.func @transform_4(%arg0: i32) -> (i32, i32, i32) {
    %c0_i32 = arith.constant 0 : i32
    %c0_i32_0 = arith.constant 0 : i32
    %c0_i32_1 = arith.constant 0 : i32
    return %arg0, %c0_i32, %c0_i32_0 : i32, i32, i32
  }
}

</mosaic_0001>

<llo_original>
// kernel: tpu_custom_call.1
$region0: #{tpu_custom_call.1}
  #allocation0 [shape = 'u32[]', space=smem, size = 0x4, offset = 0x4, fixed_abs, tag = 'smem constant byte address 0x4 - core index']
  #allocation1 [shape = 'u32[72,128]{1,0:T(1,128)}', space=vmem, size = 0x9000, scoped, tag = 'internal scratch']
  %s0 = inlined_call_operand.vmem [shape: f32[2,8,32], index: 0, kind: input, shape index: {}]
  %s1 = inlined_call_operand.vmem [shape: f32[2,8,1], index: 1, kind: input, shape index: {}]
  %s2 = inlined_call_operand.hbm [shape: bf16[32,64], index: 2, kind: input, shape index: {}]
  %s3 = inlined_call_operand.vmem [shape: f32[1,64], index: 3, kind: input, shape index: {}]
  %s4 = inlined_call_operand.hbm [shape: f32[2,1,32], index: 4, kind: output, shape index: {}]
  %s5 = sld [smem:[#allocation0]]
  $region30: #{tpu_custom_call.1} parent=0
    _
  %s7 = ssub.s32 1, %s5
  %s8 = scalar_select 0, %s7, %s5
  $region1: #{tpu_custom_call.1} parent=0
    #allocation2 [shape = 'u8[8192]{0}', space=vmem, size = 0x2000, scoped, tag = 'input window, operand 2, single buffered']
    #allocation3 [shape = 's32[1]{0}', space=sflag, size = 0x4, scoped, tag = 'scoped memory for tpu_custom_call.1']
    #allocation4 [shape = 's32[1]{0}', space=sflag, size = 0x4, scoped, tag = 'scoped memory for tpu_custom_call.1']
    #allocation5 [shape = 'u8[1024]{0}', space=vmem, size = 0x400, scoped, tag = 'output window, operand 0, single buffered']
    %9 = vsyncpa [#allocation3], 0
    %10 = vsyncpa [#allocation4], 0
    // Predicated region
    $region2: #{tpu_custom_call.1} parent=1 // pred_check
      _
    $region3: #{tpu_custom_call.1} parent=1 // pred_check_branch
      %12 = sbr.rel (0) target = $region5
    $region4: #{tpu_custom_call.1} parent=1 // pred_region
      _
    $region5: #{tpu_custom_call.1} parent=1 // pred_fallthru
      _
    // Predicated region
    $region6: #{tpu_custom_call.1} parent=1 // pred_check
      _
    $region7: #{tpu_custom_call.1} parent=1 // pred_check_branch
      %14 = sbr.rel (0) target = $region9
    $region8: #{tpu_custom_call.1} parent=1 // pred_region
      _
    $region9: #{tpu_custom_call.1} parent=1 // pred_fallthru
      _
    // Predicated region
    $region10: #{tpu_custom_call.1} parent=1 // pred_check
      _
    $region11: #{tpu_custom_call.1} parent=1 // pred_check_branch
      %16 = sbr.rel (0) target = $region13
    $region12: #{tpu_custom_call.1} parent=1 // pred_region
      %18 = vsyncadd [#allocation3], 0
      %s19 = sshll.u32 %s2, 4
      %s20 = int_to_ptr.hbm [resolvable:$true] %s19
      %s21 = sshll.u32 [#allocation2], 4
      %s22 = int_to_ptr.vmem [resolvable:$true] %s21
      %27 = dma.hbm_to_vmem [thread:$0]  %s20, 256, %s22, [#allocation3], 64, 64, 4
    $region13: #{tpu_custom_call.1} parent=1 // pred_fallthru
      _
    // Predicated region
    $region14: #{tpu_custom_call.1} parent=1 // pred_check
      _
    $region15: #{tpu_custom_call.1} parent=1 // pred_check_branch
      %29 = sbr.rel (0) target = $region17
    $region16: #{tpu_custom_call.1} parent=1 // pred_region
      _
    $region17: #{tpu_custom_call.1} parent=1 // pred_fallthru
      _
    // Predicated region
    $region18: #{tpu_custom_call.1} parent=1 // pred_check
      _
    $region19: #{tpu_custom_call.1} parent=1 // pred_check_branch
      %31 = sbr.rel (0) target = $region21
    $region20: #{tpu_custom_call.1} parent=1 // pred_region
      %33 = dma.done [#allocation3], 256
    $region21: #{tpu_custom_call.1} parent=1 // pred_fallthru
      _
    %v35 = vld [vmem:[%s0] sm:$0xff]
    %v36 = vld [vmem:[%s0 + $0x8] sm:$0xff]
    %vm37 = vcmask 261120
    %v38 = vsel %vm37, %v35, 0.0
    %39 = vadd.xlane.f32.xlu0 %v38
    %v40 = vpop.xlane.xlu0 %39
    %v41 = vsel %vm37, %v36, 0.0
    %42 = vadd.xlane.f32.xlu0 %v41
    %v43 = vpop.xlane.xlu0 %42
    %v44 = vrcp.pop 32.0
    %v45 = vmul.f32 32.0, %v44
    %v46 = vsub.f32 1.0, %v45
    %v47 = vmul.f32 %v44, %v46
    %v48 = vadd.f32 %v44, %v47
    %vm49 = vweird.f32 %v44
    %v50 = vsel %vm49, %v44, %v48
    %v51 = vmul.f32 %v40, %v50
    %v52 = vmul.f32 %v43, %v50
    %v53 = vsub.f32 %v35, %v51
    %v54 = vsub.f32 %v36, %v52
    %v55 = vmul.f32 %v53, %v53
    %v56 = vmul.f32 %v54, %v54
    %v57 = vsel %vm37, %v55, 0.0
    %58 = vadd.xlane.f32.xlu0 %v57
    %v59 = vpop.xlane.xlu0 %58
    %v60 = vsel %vm37, %v56, 0.0
    %61 = vadd.xlane.f32.xlu0 %v60
    %v62 = vpop.xlane.xlu0 %61
    %v63 = vmul.f32 %v59, %v50
    %v64 = vmul.f32 %v62, %v50
    %v65 = vadd.f32 %v63, 1e-05
    %v66 = vadd.f32 %v64, 1e-05
    %v67 = vrsqrt.pop %v65
    %v68 = vmul.f32 %v67, %v65
    %v69 = vmul.f32 %v68, %v67
    %v70 = vmul.f32 0.5, %v69
    %v71 = vsub.f32 1.5, %v70
    %v72 = vmul.f32 %v67, %v71
    %vm73 = vweird.f32 %v65
    %vm74 = vweird.f32 %v67
    %vm75 = vmor %vm73, %vm74
    %v76 = vsel %vm75, %v67, %v72
    %v77 = vrsqrt.pop %v66
    %v78 = vmul.f32 %v77, %v66
    %v79 = vmul.f32 %v78, %v77
    %v80 = vmul.f32 0.5, %v79
    %v81 = vsub.f32 1.5, %v80
    %v82 = vmul.f32 %v77, %v81
    %vm83 = vweird.f32 %v66
    %vm84 = vweird.f32 %v77
    %vm85 = vmor %vm83, %vm84
    %v86 = vsel %vm85, %v77, %v82
    %v87 = vmul.f32 %v53, %v76
    %v88 = vmul.f32 %v54, %v86
    %v89 = vpack.c.bf16 %v88, %v87
    %v90 = vld [vmem:[#allocation2] sm:$0xf]
    %v91 = vld [vmem:[#allocation2 + $0x4] sm:$0xf]
    %v92 = vld [vmem:[#allocation2 + $0x8] sm:$0xf]
    %v93 = vld [vmem:[#allocation2 + $0xc] sm:$0xf]
    %v94 = vld [vmem:[%s3] sm:$0x1]
    %v96 = vperm.slane %v94, 0
    %v102 = vunpack.c.l.b16 %v90
    %v103 = vunpack.c.l.b16 %v91
    %v104 = vunpack.c.l.b16 %v92
    %v105 = vunpack.c.l.b16 %v93
    %v106 = vpack.c.b16 %v103, %v102
    %v107 = vpack.c.b16 %v105, %v104
    %v111 = vsel %vm37, %v89, 0
    %113 = vmatpush.bf16.msra.mxu0 0
    %114 = vmatpush.bf16.msra.mxu0 0
    %115 = vmatpush.bf16.msra.mxu0 0
    %116 = vmatpush.bf16.msra.mxu0 0
    %117 = vmatpush.bf16.msra.mxu0 0
    %118 = vmatpush.bf16.msra.mxu0 0
    %119 = vmatpush.bf16.msra.mxu0 %v107
    %120 = vmatpush.bf16.msra.mxu0 %v106
    %121 = vmatmul.bf16.gmra.mxu0 %v111
    %v122 = vpop.f32.mrf.mxu0
    %v123 = vadd.f32 %v96, %v122
    %v124 = vpop.f32.mrf.mxu0
    %v125 = vadd.f32 %v96, %v124
    %126 = vdwg.mxu0
    %v127 = vld [vmem:[%s1] sm:$0xff]
    %v128 = vld [vmem:[%s1 + $0x8] sm:$0xff]
    %v129 = vsub.f32 %v127, 1.0
    %v130 = vsub.f32 %v128, 1.0
    %v131 = vmul.f32 %v129, 10000.0
    %v132 = vmul.f32 %v130, 10000.0
    %134 = vset.pattern.permute.xlu0 0
    %135 = vperm.xlu0 %134, %v131
    %v136 = vpop.permute.xlu0 %135
    %139 = vset.pattern.permute.xlu0 0
    %140 = vperm.xlu0 %139, %v132
    %v141 = vpop.permute.xlu0 %140
    %v143 = vadd.f32 %v123, %v136
    %v144 = vadd.f32 %v125, %v141
    %vm145 = vcmask 523520
    %v146 = vsel %vm145, %v143, -inf
    %v147 = vrot.slane %v146, 4
    %v148 = vmax.f32 %v146, %v147
    %v149 = vrot.slane %v148, 2
    %v150 = vmax.f32 %v148, %v149
    %v151 = vrot.slane %v150, 1
    %v152 = vmax.f32 %v150, %v151
    %v153 = vsel %vm145, %v144, -inf
    %v154 = vrot.slane %v153, 4
    %v155 = vmax.f32 %v153, %v154
    %v156 = vrot.slane %v155, 2
    %v157 = vmax.f32 %v155, %v156
    %v158 = vrot.slane %v157, 1
    %v159 = vmax.f32 %v157, %v158
    %v160 = vsub.f32 %v143, %v152
    %v161 = vsub.f32 %v144, %v159
    %v162 = vmul.f32 %v160, 1.442695
    %v163 = vpow.pop %v162
    %v164 = vmul.f32 %v161, 1.442695
    %v165 = vpow.pop %v164
    %v166 = vsel %vm145, %v163, 0.0
    %v167 = vrot.slane %v166, 4
    %v168 = vadd.f32 %v166, %v167
    %v169 = vrot.slane %v168, 2
    %v170 = vadd.f32 %v168, %v169
    %v171 = vrot.slane %v170, 1
    %v172 = vadd.f32 %v170, %v171
    %v173 = vsel %vm145, %v165, 0.0
    %v174 = vrot.slane %v173, 4
    %v175 = vadd.f32 %v173, %v174
    %v176 = vrot.slane %v175, 2
    %v177 = vadd.f32 %v175, %v176
    %v178 = vrot.slane %v177, 1
    %v179 = vadd.f32 %v177, %v178
    %v180 = vrcp.pop %v172
    %v181 = vrcp.pop %v179
    %v182 = vmul.f32 %v163, %v180
    %v183 = vmul.f32 %v165, %v181
    %185 = vset.pattern.permute.xlu0 0
    %186 = vperm.xlu0 %185, %v127
    %v187 = vpop.permute.xlu0 %186
    %190 = vset.pattern.permute.xlu0 0
    %191 = vperm.xlu0 %190, %v128
    %v192 = vpop.permute.xlu0 %191
    %v194 = vmul.f32 %v182, %v187
    %v195 = vmul.f32 %v183, %v192
    %198 = vrot.lane.b32.xlu0 %v123, 32
    %v199 = vpop.permute.xlu0 %198
    %200 = vrot.lane.b32.xlu0 %v125, 32
    %v201 = vpop.permute.xlu0 %200
    %v204 = vmul.f32 %v194, %v199
    %v205 = vmul.f32 %v195, %v201
    %v206 = vsel %vm145, %v204, 0.0
    %v207 = vrot.slane %v206, 4
    %v208 = vadd.f32 %v206, %v207
    %v209 = vrot.slane %v208, 2
    %v210 = vadd.f32 %v208, %v209
    %v211 = vrot.slane %v210, 1
    %v212 = vadd.f32 %v210, %v211
    %v213 = vsel %vm145, %v205, 0.0
    %v214 = vrot.slane %v213, 4
    %v215 = vadd.f32 %v213, %v214
    %v216 = vrot.slane %v215, 2
    %v217 = vadd.f32 %v215, %v216
    %v218 = vrot.slane %v217, 1
    %v219 = vadd.f32 %v217, %v218
    %222 = vrot.lane.b32.xlu0 %v212, 96
    %v223 = vpop.permute.xlu0 %222
    %224 = vrot.lane.b32.xlu0 %v219, 96
    %v225 = vpop.permute.xlu0 %224
    %vm228 = vcmask 253952
    %229 = vst.msk [vmem:[#allocation5] sm:$0x1] %vm228, %v223
    %230 = vst.msk [vmem:[#allocation5 + $0x1] sm:$0x1] %vm228, %v225
    // Predicated region
    $region22: #{tpu_custom_call.1} parent=1 // pred_check
      _
    $region23: #{tpu_custom_call.1} parent=1 // pred_check_branch
      %232 = sbr.rel (0) target = $region25
    $region24: #{tpu_custom_call.1} parent=1 // pred_region
      %234 = vsyncadd [#allocation4], 0
      %s235 = sshll.u32 [#allocation5], 4
      %s236 = int_to_ptr.vmem [resolvable:$true] %s235
      %s237 = sshll.u32 %s4, 4
      %s238 = int_to_ptr.hbm [resolvable:$true] %s237
      %243 = dma.vmem_to_hbm [thread:$0]  %s236, 32, %s238, [#allocation4], 16, 16, 1
    $region25: #{tpu_custom_call.1} parent=1 // pred_fallthru
      _
    // Predicated region
    $region26: #{tpu_custom_call.1} parent=1 // pred_check
      _
    $region27: #{tpu_custom_call.1} parent=1 // pred_check_branch
      %245 = sbr.rel (0) target = $region29
    $region28: #{tpu_custom_call.1} parent=1 // pred_region
      %247 = dma.done [#allocation4], 32
    $region29: #{tpu_custom_call.1} parent=1 // pred_fallthru
      _
    %248 = vsyncpa [#allocation3], 1
    %249 = vsyncpa [#allocation4], 1

</llo_original>
